<compile_context>
chip_gen: v7x
topology: tpu7x:2x2x1
jax: 0.10.0
libtpu: 0.0.40
codegen_flags: <defaults>
</compile_context>

<pallas_src>
import jax
import jax.numpy as jnp
from jax.experimental import pallas as pl
from jax.experimental.pallas import tpu as pltpu


# ----------------------------------------------------------------------------
# Pallas kernel: one (NB, C, HW) block of images per grid step
# ----------------------------------------------------------------------------
def aff_kernel(x_ref, r_ref,
               wcat_ref,                 # (2*Ci, C) bf16: [wl1 ; wg1/HW] fused
               bl1_ref, bg1_ref,         # (Ci, 1) f32
               wl2_ref, bl2_ref,         # (C, Ci) bf16, (C, 1) f32
               wg2_ref, bg2_ref,         # (C, Ci) bf16, (C, 1) f32
               o_ref):
    NB = x_ref.shape[0]
    Ci = bl1_ref.shape[0]

    # Static (unrolled) loop over the images in this block; each image needs
    # the full HW extent for the global-average-pool branch.
    for b in range(NB):
        xa = x_ref[b] + r_ref[b]                                  # (C, HW) f32
        xa_bf = xa.astype(jnp.bfloat16)

        # Fused first 1x1 conv for local + global branches: (2Ci, C) @ (C, HW)
        # (global rows pre-scaled by 1/HW so the pool becomes a plain sum).
        h = jnp.dot(wcat_ref[...], xa_bf,
                    preferred_element_type=jnp.float32)           # (2Ci, HW)

        # ---- local branch: conv -> BN -> ReLU -> conv -> BN (BN folded) ----
        hl = jnp.maximum(h[:Ci, :] + bl1_ref[...], 0.0)           # (Ci, HW)
        xl = jnp.dot(wl2_ref[...], hl.astype(jnp.bfloat16),
                     preferred_element_type=jnp.float32) + bl2_ref[...]  # (C, HW)

        # ---- global branch: avgpool -> conv -> BN -> ReLU -> conv -> BN ----
        # mean commutes with the (linear, BN-folded) 1x1 conv, so reuse h;
        # the 1/HW factor is already folded into wcat's global rows.
        hg = jnp.maximum(jnp.sum(h[Ci:, :], axis=1, keepdims=True)
                         + bg1_ref[...], 0.0)                      # (Ci, 1)
        xg = jnp.dot(wg2_ref[...].astype(jnp.float32), hg) + bg2_ref[...]  # (C, 1)

        # ---- sigmoid on the EUP slot: sigmoid(z) = 0.5*tanh(0.5*z) + 0.5 ----
        wei = 0.5 * jnp.tanh(0.5 * (xl + xg)) + 0.5                # (C, HW)

        # ---- blend: out = 2*x*wei + 2*r*(1-wei) = 2*(r + (x-r)*wei) ----
        # Re-read x/r from VMEM here so their f32 values are not live across
        # the matmul / sigmoid region above.
        x = x_ref[b]
        r = r_ref[b]
        o_ref[b] = (2.0 * (r + (x - r) * wei)).astype(o_ref.dtype)


# ----------------------------------------------------------------------------
# One-time parameter preparation (fuse first convs, fold 1/HW, cast weights)
# ----------------------------------------------------------------------------
def prepare_aff_params(params, H, W):
    HW = H * W
    # Fuse the two first-layer 1x1 conv weights into a single (2Ci, C) matrix;
    # fold the global average pool's 1/HW into the global rows.
    wcat = jnp.concatenate([params["wl1"], params["wg1"] / float(HW)],
                           axis=0).astype(jnp.bfloat16)
    return dict(
        wcat=wcat,
        bl1=params["bl1"].astype(jnp.float32),
        bg1=params["bg1"].astype(jnp.float32),
        wl2=params["wl2"].astype(jnp.bfloat16),
        bl2=params["bl2"].astype(jnp.float32),
        wg2=params["wg2"].astype(jnp.bfloat16),
        bg2=params["bg2"].astype(jnp.float32),
    )


def _choose_batch_block(N, per_image_bytes, target_bytes=2 << 20):
    """Images per grid step: big enough to amortize step overhead, block
    <= ~2 MiB, and grid >= 2 when possible (v7x has 2 TensorCores)."""
    divisors = [d for d in range(1, N + 1) if N % d == 0]
    nb = 1
    for d in divisors:
        if d * per_image_bytes <= target_bytes:
            nb = d
    if N // nb < 2:
        cands = [d for d in divisors
                 if N // d >= 2 and d * per_image_bytes <= target_bytes]
        if cands:
            nb = max(cands)
    return nb


# ----------------------------------------------------------------------------
# Wrapper: NCHW -> (N, C, HW) view (free) + pallas_call
# ----------------------------------------------------------------------------
def aff_forward(x_nchw, res_nchw, prep, out_dtype=None):
    N, C, H, W = x_nchw.shape
    HW = H * W
    out_dtype = x_nchw.dtype if out_dtype is None else out_dtype
    out_bytes = jnp.dtype(out_dtype).itemsize

    # Free reshape, no transpose / cast -- the kernel reads f32 directly and
    # only casts the matmul operand to bf16 internally.
    x2 = x_nchw.reshape(N, C, HW)
    r2 = res_nchw.reshape(N, C, HW)

    weights = [prep["wcat"], prep["bl1"], prep["bg1"],
               prep["wl2"], prep["bl2"], prep["wg2"], prep["bg2"]]
    Ci = prep["bl1"].shape[0]

    in_bytes = x2.dtype.itemsize
    per_image_bytes = C * HW * (2 * in_bytes + out_bytes)
    NB = _choose_batch_block(N, per_image_bytes)
    grid_n = N // NB

    img_spec = pl.BlockSpec((NB, C, HW), lambda b: (b, 0, 0))

    def full_spec(arr):
        nd = arr.ndim
        return pl.BlockSpec(arr.shape, lambda b, _nd=nd: (0,) * _nd)

    weight_bytes = sum(int(a.size) * a.dtype.itemsize for a in weights)
    block_bytes = NB * per_image_bytes
    # Double-buffered x/r/out blocks + (double-buffered) weights + headroom
    # for in-kernel intermediates (h, xl, wei, ...) and compiler scratch.
    vmem_limit = int(2 * block_bytes + 2 * weight_bytes + (4 << 20))

    # Advisory cost estimate so XLA schedules neighbors around this short op.
    flops = int(N) * (2 * (2 * Ci) * C * HW      # fused first conv
                      + 2 * C * Ci * HW          # local second conv
                      + 2 * C * Ci               # global second conv
                      + 12 * C * HW)             # elementwise blend/relu/etc.
    cost = pl.CostEstimate(
        flops=flops,
        transcendentals=int(N) * C * HW,
        bytes_accessed=int(N) * C * HW * (2 * in_bytes + out_bytes) + weight_bytes,
    )

    # TODO(synk): for very large images (a (NB, C, HW) block overflowing v7x's
    # 64 MiB VMEM), add an HW tile axis to the grid; the global mean then
    # needs a two-pass (accumulate-then-finalize) structure.
    out = pl.pallas_call(
        aff_kernel,
        out_shape=jax.ShapeDtypeStruct((N, C, HW), out_dtype),
        grid=(grid_n,),
        in_specs=[img_spec, img_spec] + [full_spec(a) for a in weights],
        out_specs=pl.BlockSpec((NB, C, HW), lambda b: (b, 0, 0)),
        compiler_params=pltpu.CompilerParams(
            dimension_semantics=("parallel",),
            vmem_limit_bytes=vmem_limit),
        cost_estimate=cost,
    )(x2, r2, *weights)

    return out.reshape(N, C, H, W)


# ----------------------------------------------------------------------------
# Deterministic synthetic parameters (BN folded, eval-mode semantics)
# Conv weights stored as (out_channels, in_channels); biases as (n, 1) columns.
# ----------------------------------------------------------------------------
def _fold_bn(w, b, gamma, beta, mean, var, eps=1e-5):
    # y = gamma * ((W @ x + b) - mean) / sqrt(var + eps) + beta
    s = gamma / jnp.sqrt(var + eps)
    return w * s[:, None], s * (b - mean) + beta


def make_params(key, C, r=4):
    Ci = C // r
    ks = list(jax.random.split(key, 40))

    def nrm(shape, scale=0.2):
        return scale * jax.random.normal(ks.pop(), shape, jnp.float32)

    def bn(n):
        gamma = 1.0 + 0.1 * jax.random.normal(ks.pop(), (n,), jnp.float32)
        beta = 0.1 * jax.random.normal(ks.pop(), (n,), jnp.float32)
        mean = 0.1 * jax.random.normal(ks.pop(), (n,), jnp.float32)
        var = 1.0 + 0.1 * jnp.abs(jax.random.normal(ks.pop(), (n,), jnp.float32))
        return gamma, beta, mean, var

    def conv_bn_relu_conv_bn():
        w1, b1 = nrm((Ci, C)), nrm((Ci,), 0.05)
        w2, b2 = nrm((C, Ci)), nrm((C,), 0.05)
        w1, b1 = _fold_bn(w1, b1, *bn(Ci))
        w2, b2 = _fold_bn(w2, b2, *bn(C))
        return w1, b1, w2, b2

    wl1, bl1, wl2, bl2 = conv_bn_relu_conv_bn()   # local_att
    wg1, bg1, wg2, bg2 = conv_bn_relu_conv_bn()   # global_att

    p = dict(wl1=wl1, bl1=bl1, wl2=wl2, bl2=bl2,
             wg1=wg1, bg1=bg1, wg2=wg2, bg2=bg2)
    for k in list(p.keys()):
        if p[k].ndim == 1:
            p[k] = p[k][:, None]
    return p


# ----------------------------------------------------------------------------
# Pure-JAX reference (module math order, BN folded, eval mode).
# Matmul operands are rounded to bf16 like the kernel does; activations (x, r)
# and the final blend stay f32 exactly like the kernel.
# ----------------------------------------------------------------------------
def aff_reference(x_nchw, r_nchw, params):
    N, C, H, W = x_nchw.shape
    HW = H * W
    bf = lambda a: a.astype(jnp.bfloat16).astype(jnp.float32)

    x = x_nchw.reshape(N, C, HW).astype(jnp.float32)
    r = r_nchw.reshape(N, C, HW).astype(jnp.float32)
    wl1, wl2 = bf(params["wl1"]), bf(params["wl2"])
    wg1, wg2 = bf(params["wg1"]), bf(params["wg2"])
    bl1, bl2 = params["bl1"], params["bl2"]
    bg1, bg2 = params["bg1"], params["bg2"]

    xa = x + r

    # local branch: 1x1 conv -> (folded BN) -> ReLU -> 1x1 conv -> (folded BN)
    hl = jnp.maximum(jnp.einsum("oc,ncp->nop", wl1, bf(xa)) + bl1[None], 0.0)
    xl = jnp.einsum("oc,ncp->nop", wl2, bf(hl)) + bl2[None]

    # global branch: avg pool -> 1x1 conv -> (BN) -> ReLU -> 1x1 conv -> (BN)
    m = jnp.mean(xa, axis=2, keepdims=True)
    hg = jnp.maximum(jnp.einsum("oc,ncp->nop", wg1, bf(m)) + bg1[None], 0.0)
    xg = jnp.einsum("oc,ncp->nop", wg2, hg) + bg2[None]

    wei = jax.nn.sigmoid(xl + xg)
    out = 2.0 * x * wei + 2.0 * r * (1.0 - wei)
    return out.reshape(N, C, H, W)


if __name__ == "__main__":
    # channels=64, r=4 -> inter_channels=16; H=W=16 -> HW=256 (lane-dense).
    N, C, H, W = 2, 64, 16, 16
    key = jax.random.PRNGKey(0)
    kx, kr, kp = jax.random.split(key, 3)

    x = jax.random.normal(kx, (N, C, H, W), jnp.float32)
    residual = jax.random.normal(kr, (N, C, H, W), jnp.float32)
    params = make_params(kp, C, r=4)
    prep = prepare_aff_params(params, H, W)   # one-time weight prep

    out = jax.block_until_ready(aff_forward(x, residual, prep))
    ref = jax.block_until_ready(aff_reference(x, residual, params))

    assert out.shape == (N, C, H, W)
    assert out.dtype == x.dtype
    max_err = float(jnp.max(jnp.abs(out - ref)))
    assert jnp.allclose(out, ref, atol=2e-2, rtol=2e-2), \
        f"Pallas output mismatch vs reference (max abs err {max_err})"

    print("KERNEL_OK")
</pallas_src>

<mosaic_0001>
module attributes {stable_mosaic.version = 11 : i64} {
  func.func @aff_kernel(%arg0: i32, %arg1: memref<1x64x256xf32, #tpu.memory_space<vmem>>, %arg2: memref<1x64x256xf32, #tpu.memory_space<vmem>>, %arg3: memref<32x64xbf16, #tpu.memory_space<vmem>>, %arg4: memref<16x1xf32, #tpu.memory_space<vmem>>, %arg5: memref<16x1xf32, #tpu.memory_space<vmem>>, %arg6: memref<64x16xbf16, #tpu.memory_space<vmem>>, %arg7: memref<64x1xf32, #tpu.memory_space<vmem>>, %arg8: memref<64x16xbf16, #tpu.memory_space<vmem>>, %arg9: memref<64x1xf32, #tpu.memory_space<vmem>>, %arg10: memref<1x64x256xf32, #tpu.memory_space<vmem>>) attributes {dimension_semantics = [#tpu.dimension_semantics<parallel>], iteration_bounds = array<i64: 2>, scalar_prefetch = 0 : i64, scratch_operands = 0 : i64, tpu.core_type = #tpu.core_type<tc>, window_params = [{transform_indices = @transform_0, window_bounds = array<i64: 1, 64, 256>}, {transform_indices = @transform_1, window_bounds = array<i64: 1, 64, 256>}, {pipeline_mode = #tpu.pipeline_mode<synchronous>, transform_indices = @transform_2, window_bounds = array<i64: 32, 64>}, {pipeline_mode = #tpu.pipeline_mode<synchronous>, transform_indices = @transform_3, window_bounds = array<i64: 16, 1>}, {pipeline_mode = #tpu.pipeline_mode<synchronous>, transform_indices = @transform_4, window_bounds = array<i64: 16, 1>}, {pipeline_mode = #tpu.pipeline_mode<synchronous>, transform_indices = @transform_5, window_bounds = array<i64: 64, 16>}, {pipeline_mode = #tpu.pipeline_mode<synchronous>, transform_indices = @transform_6, window_bounds = array<i64: 64, 1>}, {pipeline_mode = #tpu.pipeline_mode<synchronous>, transform_indices = @transform_7, window_bounds = array<i64: 64, 16>}, {pipeline_mode = #tpu.pipeline_mode<synchronous>, transform_indices = @transform_8, window_bounds = array<i64: 64, 1>}, {transform_indices = @transform_9, window_bounds = array<i64: 1, 64, 256>}]} {
    %c0 = arith.constant 0 : index
    %c0_0 = arith.constant 0 : index
    %c0_1 = arith.constant 0 : index
    %0 = vector.load %arg1[%c0, %c0_0, %c0_1] : memref<1x64x256xf32, #tpu.memory_space<vmem>>, vector<1x64x256xf32>
    %1 = vector.shape_cast %0 : vector<1x64x256xf32> to vector<64x256xf32>
    %c0_2 = arith.constant 0 : index
    %c0_3 = arith.constant 0 : index
    %c0_4 = arith.constant 0 : index
    %2 = vector.load %arg2[%c0_2, %c0_3, %c0_4] : memref<1x64x256xf32, #tpu.memory_space<vmem>>, vector<1x64x256xf32>
    %3 = vector.shape_cast %2 : vector<1x64x256xf32> to vector<64x256xf32>
    %4 = arith.addf %1, %3 : vector<64x256xf32>
    %5 = arith.truncf %4 : vector<64x256xf32> to vector<64x256xbf16>
    %c0_5 = arith.constant 0 : index
    %c0_6 = arith.constant 0 : index
    %6 = vector.load %arg3[%c0_5, %c0_6] : memref<32x64xbf16, #tpu.memory_space<vmem>>, vector<32x64xbf16>
    %cst = arith.constant dense<0.000000e+00> : vector<32x256xf32>
    %7 = tpu.matmul %6, %5, %cst {dimension_numbers = #tpu.dot_dimension_numbers<[1], [0], [0], [1], [0, 0, 1, 1], [], []>} : vector<32x64xbf16>, vector<64x256xbf16>, vector<32x256xf32> -> vector<32x256xf32>
    %8 = vector.extract_strided_slice %7 {offsets = [0, 0], sizes = [16, 256], strides = [1, 1]} : vector<32x256xf32> to vector<16x256xf32>
    %c0_7 = arith.constant 0 : index
    %c0_8 = arith.constant 0 : index
    %9 = vector.load %arg4[%c0_7, %c0_8] : memref<16x1xf32, #tpu.memory_space<vmem>>, vector<16x1xf32>
    %10 = vector.broadcast %9 : vector<16x1xf32> to vector<16x256xf32>
    %11 = arith.addf %8, %10 : vector<16x256xf32>
    %cst_9 = arith.constant 0.000000e+00 : f32
    %12 = vector.broadcast %cst_9 : f32 to vector<16x256xf32>
    %13 = arith.maximumf %11, %12 : vector<16x256xf32>
    %c0_10 = arith.constant 0 : index
    %c0_11 = arith.constant 0 : index
    %14 = vector.load %arg6[%c0_10, %c0_11] : memref<64x16xbf16, #tpu.memory_space<vmem>>, vector<64x16xbf16>
    %15 = arith.truncf %13 : vector<16x256xf32> to vector<16x256xbf16>
    %cst_12 = arith.constant dense<0.000000e+00> : vector<64x256xf32>
    %16 = tpu.matmul %14, %15, %cst_12 {dimension_numbers = #tpu.dot_dimension_numbers<[1], [0], [0], [1], [0, 0, 1, 1], [], []>} : vector<64x16xbf16>, vector<16x256xbf16>, vector<64x256xf32> -> vector<64x256xf32>
    %c0_13 = arith.constant 0 : index
    %c0_14 = arith.constant 0 : index
    %17 = vector.load %arg7[%c0_13, %c0_14] : memref<64x1xf32, #tpu.memory_space<vmem>>, vector<64x1xf32>
    %18 = vector.broadcast %17 : vector<64x1xf32> to vector<64x256xf32>
    %19 = arith.addf %16, %18 : vector<64x256xf32>
    %20 = vector.extract_strided_slice %7 {offsets = [16, 0], sizes = [16, 256], strides = [1, 1]} : vector<32x256xf32> to vector<16x256xf32>
    %cst_15 = arith.constant dense<0.000000e+00> : vector<16xf32>
    %21 = vector.multi_reduction <add>, %20, %cst_15 [1] : vector<16x256xf32> to vector<16xf32>
    %22 = vector.shape_cast %21 : vector<16xf32> to vector<16x1xf32>
    %c0_16 = arith.constant 0 : index
    %c0_17 = arith.constant 0 : index
    %23 = vector.load %arg5[%c0_16, %c0_17] : memref<16x1xf32, #tpu.memory_space<vmem>>, vector<16x1xf32>
    %24 = arith.addf %22, %23 : vector<16x1xf32>
    %cst_18 = arith.constant 0.000000e+00 : f32
    %25 = vector.broadcast %cst_18 : f32 to vector<16x1xf32>
    %26 = arith.maximumf %24, %25 : vector<16x1xf32>
    %c0_19 = arith.constant 0 : index
    %c0_20 = arith.constant 0 : index
    %27 = vector.load %arg8[%c0_19, %c0_20] : memref<64x16xbf16, #tpu.memory_space<vmem>>, vector<64x16xbf16>
    %28 = arith.extf %27 : vector<64x16xbf16> to vector<64x16xf32>
    %cst_21 = arith.constant dense<0.000000e+00> : vector<64x1xf32>
    %29 = tpu.matmul %28, %26, %cst_21 {dimension_numbers = #tpu.dot_dimension_numbers<[1], [0], [0], [1], [0, 0, 1, 1], [], []>} : vector<64x16xf32>, vector<16x1xf32>, vector<64x1xf32> -> vector<64x1xf32>
    %c0_22 = arith.constant 0 : index
    %c0_23 = arith.constant 0 : index
    %30 = vector.load %arg9[%c0_22, %c0_23] : memref<64x1xf32, #tpu.memory_space<vmem>>, vector<64x1xf32>
    %31 = arith.addf %29, %30 : vector<64x1xf32>
    %32 = vector.broadcast %31 : vector<64x1xf32> to vector<64x256xf32>
    %33 = arith.addf %19, %32 : vector<64x256xf32>
    %cst_24 = arith.constant 5.000000e-01 : f32
    %34 = vector.broadcast %cst_24 : f32 to vector<64x256xf32>
    %35 = arith.mulf %34, %33 : vector<64x256xf32>
    %36 = math.tanh %35 : vector<64x256xf32>
    %cst_25 = arith.constant 5.000000e-01 : f32
    %37 = vector.broadcast %cst_25 : f32 to vector<64x256xf32>
    %38 = arith.mulf %37, %36 : vector<64x256xf32>
    %cst_26 = arith.constant 5.000000e-01 : f32
    %39 = vector.broadcast %cst_26 : f32 to vector<64x256xf32>
    %40 = arith.addf %38, %39 : vector<64x256xf32>
    %c0_27 = arith.constant 0 : index
    %c0_28 = arith.constant 0 : index
    %c0_29 = arith.constant 0 : index
    %41 = vector.load %arg1[%c0_27, %c0_28, %c0_29] : memref<1x64x256xf32, #tpu.memory_space<vmem>>, vector<1x64x256xf32>
    %42 = vector.shape_cast %41 : vector<1x64x256xf32> to vector<64x256xf32>
    %c0_30 = arith.constant 0 : index
    %c0_31 = arith.constant 0 : index
    %c0_32 = arith.constant 0 : index
    %43 = vector.load %arg2[%c0_30, %c0_31, %c0_32] : memref<1x64x256xf32, #tpu.memory_space<vmem>>, vector<1x64x256xf32>
    %44 = vector.shape_cast %43 : vector<1x64x256xf32> to vector<64x256xf32>
    %45 = arith.subf %42, %44 : vector<64x256xf32>
    %46 = arith.mulf %45, %40 : vector<64x256xf32>
    %47 = arith.addf %44, %46 : vector<64x256xf32>
    %cst_33 = arith.constant 2.000000e+00 : f32
    %48 = vector.broadcast %cst_33 : f32 to vector<64x256xf32>
    %49 = arith.mulf %48, %47 : vector<64x256xf32>
    %c0_34 = arith.constant 0 : index
    %c0_35 = arith.constant 0 : index
    %c0_36 = arith.constant 0 : index
    %50 = vector.load %arg10[%c0_34, %c0_35, %c0_36] : memref<1x64x256xf32, #tpu.memory_space<vmem>>, vector<1x64x256xf32>
    %51 = vector.shape_cast %50 : vector<1x64x256xf32> to vector<64x256xf32>
    %52 = vector.shape_cast %49 : vector<64x256xf32> to vector<1x64x256xf32>
    tpu.vector_store %arg10[%c0_34, %c0_35, %c0_36], %52 {strides = array<i32>} : memref<1x64x256xf32, #tpu.memory_space<vmem>>, vector<1x64x256xf32>,
    return
  }
  func.func @transform_0(%arg0: i32) -> (i32, i32, i32) {
    %c0_i32 = arith.constant 0 : i32
    %c0_i32_0 = arith.constant 0 : i32
    %c0_i32_1 = arith.constant 0 : i32
    return %arg0, %c0_i32, %c0_i32_0 : i32, i32, i32
  }
  func.func @transform_1(%arg0: i32) -> (i32, i32, i32) {
    %c0_i32 = arith.constant 0 : i32
    %c0_i32_0 = arith.constant 0 : i32
    %c0_i32_1 = arith.constant 0 : i32
    return %arg0, %c0_i32, %c0_i32_0 : i32, i32, i32
  }
  func.func @transform_2(%arg0: i32) -> (i32, i32) {
    %c0_i32 = arith.constant 0 : i32
    %c0_i32_0 = arith.constant 0 : i32
    %c0_i32_1 = arith.constant 0 : i32
    return %c0_i32, %c0_i32_0 : i32, i32
  }
  func.func @transform_3(%arg0: i32) -> (i32, i32) {
    %c0_i32 = arith.constant 0 : i32
    %c0_i32_0 = arith.constant 0 : i32
    %c0_i32_1 = arith.constant 0 : i32
    return %c0_i32, %c0_i32_0 : i32, i32
  }
  func.func @transform_4(%arg0: i32) -> (i32, i32) {
    %c0_i32 = arith.constant 0 : i32
    %c0_i32_0 = arith.constant 0 : i32
    %c0_i32_1 = arith.constant 0 : i32
    return %c0_i32, %c0_i32_0 : i32, i32
  }
  func.func @transform_5(%arg0: i32) -> (i32, i32) {
    %c0_i32 = arith.constant 0 : i32
    %c0_i32_0 = arith.constant 0 : i32
    %c0_i32_1 = arith.constant 0 : i32
    return %c0_i32, %c0_i32_0 : i32, i32
  }
  func.func @transform_6(%arg0: i32) -> (i32, i32) {
    %c0_i32 = arith.constant 0 : i32
    %c0_i32_0 = arith.constant 0 : i32
    %c0_i32_1 = arith.constant 0 : i32
    return %c0_i32, %c0_i32_0 : i32, i32
  }
  func.func @transform_7(%arg0: i32) -> (i32, i32) {
    %c0_i32 = arith.constant 0 : i32
    %c0_i32_0 = arith.constant 0 : i32
    %c0_i32_1 = arith.constant 0 : i32
    return %c0_i32, %c0_i32_0 : i32, i32
  }
  func.func @transform_8(%arg0: i32) -> (i32, i32) {
    %c0_i32 = arith.constant 0 : i32
    %c0_i32_0 = arith.constant 0 : i32
    %c0_i32_1 = arith.constant 0 : i32
    return %c0_i32, %c0_i32_0 : i32, i32
  }
  func.func @transform_9(%arg0: i32) -> (i32, i32, i32) {
    %c0_i32 = arith.constant 0 : i32
    %c0_i32_0 = arith.constant 0 : i32
    %c0_i32_1 = arith.constant 0 : i32
    return %arg0, %c0_i32, %c0_i32_0 : i32, i32, i32
  }
}

</mosaic_0001>

<llo_original>
// kernel: tpu_custom_call.1
$region0: #{tpu_custom_call.1}
  #allocation0 [shape = 'u32[]', space=smem, size = 0x4, offset = 0x4, fixed_abs, tag = 'smem constant byte address 0x4 - core index']
  #allocation1 [shape = 'u32[144,128]{1,0:T(1,128)}', space=vmem, size = 0x12000, scoped, tag = 'internal scratch']
  %s0 = inlined_call_operand.hbm [shape: f32[2,64,256], index: 0, kind: input, shape index: {}]
  %s1 = inlined_call_operand.hbm [shape: f32[2,64,256], index: 1, kind: input, shape index: {}]
  %s2 = inlined_call_operand.vmem [shape: bf16[32,64], index: 2, kind: input, shape index: {}]
  %s3 = inlined_call_operand.vmem [shape: f32[16,1], index: 3, kind: input, shape index: {}]
  %s4 = inlined_call_operand.vmem [shape: f32[16,1], index: 4, kind: input, shape index: {}]
  %s5 = inlined_call_operand.vmem [shape: bf16[64,16], index: 5, kind: input, shape index: {}]
  %s6 = inlined_call_operand.vmem [shape: f32[64,1], index: 6, kind: input, shape index: {}]
  %s7 = inlined_call_operand.vmem [shape: bf16[64,16], index: 7, kind: input, shape index: {}]
  %s8 = inlined_call_operand.vmem [shape: f32[64,1], index: 8, kind: input, shape index: {}]
  %s9 = inlined_call_operand.hbm [shape: f32[2,64,256], index: 9, kind: output, shape index: {}]
  %s10 = sld [smem:[#allocation0]]
  $region77: #{tpu_custom_call.1} parent=0
    _
  %s12 = ssub.s32 1, %s10
  %s13 = scalar_select 0, %s12, %s10
  $region1: #{tpu_custom_call.1} parent=0
    #allocation2 [shape = 'u8[131072]{0}', space=vmem, size = 0x20000, scoped, tag = 'input window, operand 0']
    #allocation3 [shape = 's32[2]{0}', space=sflag, size = 0x8, scoped, tag = 'scoped memory for tpu_custom_call.1']
    #allocation4 [shape = 's32[2]{0}', space=sflag, size = 0x8, scoped, tag = 'scoped memory for tpu_custom_call.1']
    #allocation5 [shape = 'u8[131072]{0}', space=vmem, size = 0x20000, scoped, tag = 'input window, operand 1']
    #allocation6 [shape = 's32[2]{0}', space=sflag, size = 0x8, scoped, tag = 'scoped memory for tpu_custom_call.1']
    #allocation7 [shape = 'u8[131072]{0}', space=vmem, size = 0x20000, scoped, tag = 'output window, operand 0']
    %14 = vsyncpa [#allocation3], 0
    %s15 = scalar_lea.sflag [#allocation3], 1
    %16 = vsyncpa %s15, 0
    %17 = vsyncpa [#allocation6], 0
    %s18 = scalar_lea.sflag [#allocation6], 1
    %19 = vsyncpa %s18, 0
    %20 = vsyncpa [#allocation4], 0
    %s21 = scalar_lea.sflag [#allocation4], 1
    %22 = vsyncpa %s21, 0
    loop: start=0, step=1, limit=4
    $region2: #{tpu_custom_call.1} parent=1 // loop_pre_header
      _
    $region3: #{tpu_custom_call.1} parent=1 // loop_header
      %s24 = sphi 0, %s28
      %p25 = scmp.ge.s32.totalorder %s24, 4
      %s34 = sphi 0, %s36
      %s37 = sphi 0, %s34
      %s38 = sphi 0, %s37
      %s54 = sphi 0, %s38
      %s60 = sphi 0, %s62
      %s63 = sphi 0, %s60
      %s64 = sphi 0, %s63
      %s80 = sphi 0, %s64
      %s84 = sphi 0, %s84
      %s86 = sphi 0, %s84
      %s87 = sphi 0, %s86
      %s101 = sphi 0, %s87
      %s105 = sphi 0, %s105
      %s107 = sphi 0, %s105
      %s108 = sphi 0, %s107
      %s122 = sphi 0, %s108
      %s126 = sphi 0, %s126
      %s128 = sphi 0, %s126
      %s129 = sphi 0, %s128
      %s143 = sphi 0, %s129
      %s147 = sphi 0, %s147
      %s149 = sphi 0, %s147
      %s150 = sphi 0, %s149
      %s164 = sphi 0, %s150
      %s168 = sphi 0, %s168
      %s170 = sphi 0, %s168
      %s171 = sphi 0, %s170
      %s185 = sphi 0, %s171
      %s189 = sphi 0, %s189
      %s191 = sphi 0, %s189
      %s192 = sphi 0, %s191
      %s206 = sphi 0, %s192
      %s210 = sphi 0, %s210
      %s212 = sphi 0, %s210
      %s213 = sphi 0, %s212
      %s227 = sphi 0, %s213
      %s233 = sphi 0, %s235
      %s236 = sphi 0, %s233
      %s237 = sphi 0, %s236
      %s253 = sphi 0, %s237
    $region4: #{tpu_custom_call.1} parent=1 // loop_header_branch
      %27 = sbr.rel (%p25) target = $region8
    $region5: #{tpu_custom_call.1} parent=1 // loop_body
      %s29 = ssub.s32 %s24, 1
      %s30 = ssub.s32 %s24, 2
      %s31 = sadd.s32 %s24, 1
      %s32 = ssub.s32 %s24, %s31
      %p33 = scmp.eq.s32.totalorder %s32, 0
      %s35 = sadd.s32 %s34, 1
      %s36 = scalar_select %p33, %s34, %s35
      %p39 = pneg %p33
      %p40 = scmp.eq.s32.totalorder %s24, 1
      %p41 = por %p39, %p40
      %p42 = scmp.ne.s32.totalorder %s34, %s37
      %p43 = scmp.eq.s32.totalorder %s24, 0
      %p44 = por %p42, %p43
      %p45 = scmp.ne.s32.totalorder %s34, %s37
      %p46 = scmp.eq.s32.totalorder %s29, 1
      %p47 = por %p45, %p46
      %p48 = scmp.ne.s32.totalorder %s37, %s38
      %p49 = scmp.eq.s32.totalorder %s29, 0
      %p50 = por %p48, %p49
      %p51 = scmp.ne.s32.totalorder %s37, %s38
      %p52 = scmp.eq.s32.totalorder %s30, 1
      %p53 = por %p51, %p52
      %p55 = scmp.ne.s32.totalorder %s38, %s54
      %p56 = scmp.eq.s32.totalorder %s30, 0
      %p57 = por %p55, %p56
      %s58 = ssub.s32 %s24, %s31
      %p59 = scmp.eq.s32.totalorder %s58, 0
      %s61 = sadd.s32 %s60, 1
      %s62 = scalar_select %p59, %s60, %s61
      %p65 = pneg %p59
      %p66 = scmp.eq.s32.totalorder %s24, 1
      %p67 = por %p65, %p66
      %p68 = scmp.ne.s32.totalorder %s60, %s63
      %p69 = scmp.eq.s32.totalorder %s24, 0
      %p70 = por %p68, %p69
      %p71 = scmp.ne.s32.totalorder %s60, %s63
      %p72 = scmp.eq.s32.totalorder %s29, 1
      %p73 = por %p71, %p72
      %p74 = scmp.ne.s32.totalorder %s63, %s64
      %p75 = scmp.eq.s32.totalorder %s29, 0
      %p76 = por %p74, %p75
      %p77 = scmp.ne.s32.totalorder %s63, %s64
      %p78 = scmp.eq.s32.totalorder %s30, 1
      %p79 = por %p77, %p78
      %p81 = scmp.ne.s32.totalorder %s64, %s80
      %p82 = scmp.eq.s32.totalorder %s30, 0
      %p83 = por %p81, %p82
      %s85 = sadd.s32 %s84, 1
      %p88 = scmp.eq.s32.totalorder %s24, 1
      %p89 = scmp.ne.s32.totalorder %s84, %s86
      %p90 = scmp.eq.s32.totalorder %s24, 0
      %p91 = por %p89, %p90
      %p92 = scmp.ne.s32.totalorder %s84, %s86
      %p93 = scmp.eq.s32.totalorder %s29, 1
      %p94 = por %p92, %p93
      %p95 = scmp.ne.s32.totalorder %s86, %s87
      %p96 = scmp.eq.s32.totalorder %s29, 0
      %p97 = por %p95, %p96
      %p98 = scmp.ne.s32.totalorder %s86, %s87
      %p99 = scmp.eq.s32.totalorder %s30, 1
      %p100 = por %p98, %p99
      %p102 = scmp.ne.s32.totalorder %s87, %s101
      %p103 = scmp.eq.s32.totalorder %s30, 0
      %p104 = por %p102, %p103
      %s106 = sadd.s32 %s105, 1
      %p109 = scmp.eq.s32.totalorder %s24, 1
      %p110 = scmp.ne.s32.totalorder %s105, %s107
      %p111 = scmp.eq.s32.totalorder %s24, 0
      %p112 = por %p110, %p111
      %p113 = scmp.ne.s32.totalorder %s105, %s107
      %p114 = scmp.eq.s32.totalorder %s29, 1
      %p115 = por %p113, %p114
      %p116 = scmp.ne.s32.totalorder %s107, %s108
      %p117 = scmp.eq.s32.totalorder %s29, 0
      %p118 = por %p116, %p117
      %p119 = scmp.ne.s32.totalorder %s107, %s108
      %p120 = scmp.eq.s32.totalorder %s30, 1
      %p121 = por %p119, %p120
      %p123 = scmp.ne.s32.totalorder %s108, %s122
      %p124 = scmp.eq.s32.totalorder %s30, 0
      %p125 = por %p123, %p124
      %s127 = sadd.s32 %s126, 1
      %p130 = scmp.eq.s32.totalorder %s24, 1
      %p131 = scmp.ne.s32.totalorder %s126, %s128
      %p132 = scmp.eq.s32.totalorder %s24, 0
      %p133 = por %p131, %p132
      %p134 = scmp.ne.s32.totalorder %s126, %s128
      %p135 = scmp.eq.s32.totalorder %s29, 1
      %p136 = por %p134, %p135
      %p137 = scmp.ne.s32.totalorder %s128, %s129
      %p138 = scmp.eq.s32.totalorder %s29, 0
      %p139 = por %p137, %p138
      %p140 = scmp.ne.s32.totalorder %s128, %s129
      %p141 = scmp.eq.s32.totalorder %s30, 1
      %p142 = por %p140, %p141
      %p144 = scmp.ne.s32.totalorder %s129, %s143
      %p145 = scmp.eq.s32.totalorder %s30, 0
      %p146 = por %p144, %p145
      %s148 = sadd.s32 %s147, 1
      %p151 = scmp.eq.s32.totalorder %s24, 1
      %p152 = scmp.ne.s32.totalorder %s147, %s149
      %p153 = scmp.eq.s32.totalorder %s24, 0
      %p154 = por %p152, %p153
      %p155 = scmp.ne.s32.totalorder %s147, %s149
      %p156 = scmp.eq.s32.totalorder %s29, 1
      %p157 = por %p155, %p156
      %p158 = scmp.ne.s32.totalorder %s149, %s150
      %p159 = scmp.eq.s32.totalorder %s29, 0
      %p160 = por %p158, %p159
      %p161 = scmp.ne.s32.totalorder %s149, %s150
      %p162 = scmp.eq.s32.totalorder %s30, 1
      %p163 = por %p161, %p162
      %p165 = scmp.ne.s32.totalorder %s150, %s164
      %p166 = scmp.eq.s32.totalorder %s30, 0
      %p167 = por %p165, %p166
      %s169 = sadd.s32 %s168, 1
      %p172 = scmp.eq.s32.totalorder %s24, 1
      %p173 = scmp.ne.s32.totalorder %s168, %s170
      %p174 = scmp.eq.s32.totalorder %s24, 0
      %p175 = por %p173, %p174
      %p176 = scmp.ne.s32.totalorder %s168, %s170
      %p177 = scmp.eq.s32.totalorder %s29, 1
      %p178 = por %p176, %p177
      %p179 = scmp.ne.s32.totalorder %s170, %s171
      %p180 = scmp.eq.s32.totalorder %s29, 0
      %p181 = por %p179, %p180
      %p182 = scmp.ne.s32.totalorder %s170, %s171
      %p183 = scmp.eq.s32.totalorder %s30, 1
      %p184 = por %p182, %p183
      %p186 = scmp.ne.s32.totalorder %s171, %s185
      %p187 = scmp.eq.s32.totalorder %s30, 0
      %p188 = por %p186, %p187
      %s190 = sadd.s32 %s189, 1
      %p193 = scmp.eq.s32.totalorder %s24, 1
      %p194 = scmp.ne.s32.totalorder %s189, %s191
      %p195 = scmp.eq.s32.totalorder %s24, 0
      %p196 = por %p194, %p195
      %p197 = scmp.ne.s32.totalorder %s189, %s191
      %p198 = scmp.eq.s32.totalorder %s29, 1
      %p199 = por %p197, %p198
      %p200 = scmp.ne.s32.totalorder %s191, %s192
      %p201 = scmp.eq.s32.totalorder %s29, 0
      %p202 = por %p200, %p201
      %p203 = scmp.ne.s32.totalorder %s191, %s192
      %p204 = scmp.eq.s32.totalorder %s30, 1
      %p205 = por %p203, %p204
      %p207 = scmp.ne.s32.totalorder %s192, %s206
      %p208 = scmp.eq.s32.totalorder %s30, 0
      %p209 = por %p207, %p208
      %s211 = sadd.s32 %s210, 1
      %p214 = scmp.eq.s32.totalorder %s24, 1
      %p215 = scmp.ne.s32.totalorder %s210, %s212
      %p216 = scmp.eq.s32.totalorder %s24, 0
      %p217 = por %p215, %p216
      %p218 = scmp.ne.s32.totalorder %s210, %s212
      %p219 = scmp.eq.s32.totalorder %s29, 1
      %p220 = por %p218, %p219
      %p221 = scmp.ne.s32.totalorder %s212, %s213
      %p222 = scmp.eq.s32.totalorder %s29, 0
      %p223 = por %p221, %p222
      %p224 = scmp.ne.s32.totalorder %s212, %s213
      %p225 = scmp.eq.s32.totalorder %s30, 1
      %p226 = por %p224, %p225
      %p228 = scmp.ne.s32.totalorder %s213, %s227
      %p229 = scmp.eq.s32.totalorder %s30, 0
      %p230 = por %p228, %p229
      %s231 = ssub.s32 %s24, %s31
      %p232 = scmp.eq.s32.totalorder %s231, 0
      %s234 = sadd.s32 %s233, 1
      %s235 = scalar_select %p232, %s233, %s234
      %p238 = pneg %p232
      %p239 = scmp.eq.s32.totalorder %s24, 1
      %p240 = por %p238, %p239
      %p241 = scmp.ne.s32.totalorder %s233, %s236
      %p242 = scmp.eq.s32.totalorder %s24, 0
      %p243 = por %p241, %p242
      %p244 = scmp.ne.s32.totalorder %s233, %s236
      %p245 = scmp.eq.s32.totalorder %s29, 1
      %p246 = por %p244, %p245
      %p247 = scmp.ne.s32.totalorder %s236, %s237
      %p248 = scmp.eq.s32.totalorder %s29, 0
      %p249 = por %p247, %p248
      %p250 = scmp.ne.s32.totalorder %s236, %s237
      %p251 = scmp.eq.s32.totalorder %s30, 1
      %p252 = por %p250, %p251
      %p254 = scmp.ne.s32.totalorder %s237, %s253
      %p255 = scmp.eq.s32.totalorder %s30, 0
      %p256 = por %p254, %p255
      %p257 = scmp.le.s32.totalorder 1, %s24
      %p258 = scmp.lt.s32.totalorder %s24, 3
      %p259 = pnand %p257, %p258
      %p260 = pneg %p259
      // Predicated region
      $region9: #{tpu_custom_call.1} parent=5 // pred_check
        _
      $region10: #{tpu_custom_call.1} parent=5 // pred_check_branch
        %262 = sbr.rel (%p259) target = $region12
      $region11: #{tpu_custom_call.1} parent=5 // pred_region
        %s263 = ssub.s32 %s24, 1
        // Predicated region
        $region13: #{tpu_custom_call.1} parent=11 // pred_check
          %p264 = pneg %p97
        $region14: #{tpu_custom_call.1} parent=11 // pred_check_branch
          %266 = sbr.rel (%p264) target = $region16
        $region15: #{tpu_custom_call.1} parent=11 // pred_region
          _
        $region16: #{tpu_custom_call.1} parent=11 // pred_fallthru
          _
        // Predicated region
        $region17: #{tpu_custom_call.1} parent=11 // pred_check
          %p267 = pneg %p118
        $region18: #{tpu_custom_call.1} parent=11 // pred_check_branch
          %269 = sbr.rel (%p267) target = $region20
        $region19: #{tpu_custom_call.1} parent=11 // pred_region
          _
        $region20: #{tpu_custom_call.1} parent=11 // pred_fallthru
          _
        // Predicated region
        $region21: #{tpu_custom_call.1} parent=11 // pred_check
          %p270 = pneg %p139
        $region22: #{tpu_custom_call.1} parent=11 // pred_check_branch
          %272 = sbr.rel (%p270) target = $region24
        $region23: #{tpu_custom_call.1} parent=11 // pred_region
          _
        $region24: #{tpu_custom_call.1} parent=11 // pred_fallthru
          _
        // Predicated region
        $region25: #{tpu_custom_call.1} parent=11 // pred_check
          %p273 = pneg %p160
        $region26: #{tpu_custom_call.1} parent=11 // pred_check_branch
          %275 = sbr.rel (%p273) target = $region28
        $region27: #{tpu_custom_call.1} parent=11 // pred_region
          _
        $region28: #{tpu_custom_call.1} parent=11 // pred_fallthru
          _
        // Predicated region
        $region29: #{tpu_custom_call.1} parent=11 // pred_check
          %p276 = pneg %p181
        $region30: #{tpu_custom_call.1} parent=11 // pred_check_branch
          %278 = sbr.rel (%p276) target = $region32
        $region31: #{tpu_custom_call.1} parent=11 // pred_region
          _
        $region32: #{tpu_custom_call.1} parent=11 // pred_fallthru
          _
        // Predicated region
        $region33: #{tpu_custom_call.1} parent=11 // pred_check
          %p279 = pneg %p202
        $region34: #{tpu_custom_call.1} parent=11 // pred_check_branch
          %281 = sbr.rel (%p279) target = $region36
        $region35: #{tpu_custom_call.1} parent=11 // pred_region
          _
        $region36: #{tpu_custom_call.1} parent=11 // pred_fallthru
          _
        // Predicated region
        $region37: #{tpu_custom_call.1} parent=11 // pred_check
          %p282 = pneg %p223
        $region38: #{tpu_custom_call.1} parent=11 // pred_check_branch
          %284 = sbr.rel (%p282) target = $region40
        $region39: #{tpu_custom_call.1} parent=11 // pred_region
          _
        $region40: #{tpu_custom_call.1} parent=11 // pred_fallthru
          _
      $region12: #{tpu_custom_call.1} parent=5 // pred_fallthru
        _
      %p285 = scmp.lt.s32.totalorder %s24, 2
      // Predicated region
      $region41: #{tpu_custom_call.1} parent=5 // pred_check
        %p286 = pneg %p285
      $region42: #{tpu_custom_call.1} parent=5 // pred_check_branch
        %288 = sbr.rel (%p286) target = $region44
      $region43: #{tpu_custom_call.1} parent=5 // pred_region
        // Predicated region
        $region45: #{tpu_custom_call.1} parent=43 // pred_check
          %p289 = pneg %p44
        $region46: #{tpu_custom_call.1} parent=43 // pred_check_branch
          %291 = sbr.rel (%p289) target = $region48
        $region47: #{tpu_custom_call.1} parent=43 // pred_region
          %s292 = sand.u32 %s34, 1
          %s293 = scalar_lea.sflag [#allocation3], %s292
          %s294 = sand.u32 %s34, 1
          %s295 = smul.addr %s294, 128
          %s296 = scalar_lea.vmem [#allocation2], %s295
          %s298 = ssub.s32 2048, 2048
          %299 = vsyncadd %s293, %s298
          %s300 = smul.addr %s24, 16
          %s301 = smul.addr %s300, 128
          %s302 = scalar_lea.hbm %s0, %s301
          %s303 = sshll.u32 %s296, 4
          %s304 = int_to_ptr.vmem [resolvable:$true] %s303
          %309 = dma.hbm_to_vmem [thread:$0]  %s302, 2048, %s304, %s293, 256, 256, 16
        $region48: #{tpu_custom_call.1} parent=43 // pred_fallthru
          _
        // Predicated region
        $region49: #{tpu_custom_call.1} parent=43 // pred_check
          %p310 = pneg %p70
        $region50: #{tpu_custom_call.1} parent=43 // pred_check_branch
          %312 = sbr.rel (%p310) target = $region52
        $region51: #{tpu_custom_call.1} parent=43 // pred_region
          %s313 = sand.u32 %s60, 1
          %s314 = scalar_lea.sflag [#allocation6], %s313
          %s315 = sand.u32 %s60, 1
          %s316 = smul.addr %s315, 128
          %s317 = scalar_lea.vmem [#allocation5], %s316
          %s319 = ssub.s32 2048, 2048
          %320 = vsyncadd %s314, %s319
          %s321 = smul.addr %s24, 16
          %s322 = smul.addr %s321, 128
          %s323 = scalar_lea.hbm %s1, %s322
          %s324 = sshll.u32 %s317, 4
          %s325 = int_to_ptr.vmem [resolvable:$true] %s324
          %330 = dma.hbm_to_vmem [thread:$0]  %s323, 2048, %s325, %s314, 256, 256, 16
        $region52: #{tpu_custom_call.1} parent=43 // pred_fallthru
          _
      $region44: #{tpu_custom_call.1} parent=5 // pred_fallthru
        _
      %p331 = scmp.le.s32.totalorder 1, %s24
      %p332 = scmp.lt.s32.totalorder %s24, 3
      %p333 = pnand %p331, %p332
      %p334 = pneg %p333
      // Predicated region
      $region53: #{tpu_custom_call.1} parent=5 // pred_check
        _
      $region54: #{tpu_custom_call.1} parent=5 // pred_check_branch
        %336 = sbr.rel (%p333) target = $region56
      $region55: #{tpu_custom_call.1} parent=5 // pred_region
        %s337 = ssub.s32 %s24, 1
        %s338 = sand.u32 %s37, 1
        %s339 = scalar_lea.sflag [#allocation3], %s338
        %s340 = sand.u32 %s37, 1
        %s341 = smul.addr %s340, 128
        %s342 = scalar_lea.vmem [#allocation2], %s341
        // Predicated region
        $region57: #{tpu_custom_call.1} parent=55 // pred_check
          %p343 = pneg %p50
        $region58: #{tpu_custom_call.1} parent=55 // pred_check_branch
          %345 = sbr.rel (%p343) target = $region60
        $region59: #{tpu_custom_call.1} parent=55 // pred_region
          %346 = dma.done %s339, 2048
        $region60: #{tpu_custom_call.1} parent=55 // pred_fallthru
          _
        %s347 = sand.u32 %s63, 1
        %s348 = scalar_lea.sflag [#allocation6], %s347
        %s349 = sand.u32 %s63, 1
        %s350 = smul.addr %s349, 128
        %s351 = scalar_lea.vmem [#allocation5], %s350
        // Predicated region
        $region61: #{tpu_custom_call.1} parent=55 // pred_check
          %p352 = pneg %p76
        $region62: #{tpu_custom_call.1} parent=55 // pred_check_branch
          %354 = sbr.rel (%p352) target = $region64
        $region63: #{tpu_custom_call.1} parent=55 // pred_region
          %355 = dma.done %s348, 2048
        $region64: #{tpu_custom_call.1} parent=55 // pred_fallthru
          _
        %s356 = sand.u32 %s37, 1
        %s357 = scalar_lea.sflag [#allocation3], %s356
        %s358 = sand.u32 %s37, 1
        %s359 = smul.addr %s358, 128
        %s360 = scalar_lea.vmem [#allocation2], %s359
        %p361 = pneg %p50
        %p362 = pneg %p47
        %s363 = sand.u32 %s63, 1
        %s364 = scalar_lea.sflag [#allocation6], %s363
        %s365 = sand.u32 %s63, 1
        %s366 = smul.addr %s365, 128
        %s367 = scalar_lea.vmem [#allocation5], %s366
        %p368 = pneg %p76
        %p369 = pneg %p73
        %p370 = pneg %p97
        %p371 = pneg %p94
        %p372 = pneg %p118
        %p373 = pneg %p115
        %p374 = pneg %p139
        %p375 = pneg %p136
        %p376 = pneg %p160
        %p377 = pneg %p157
        %p378 = pneg %p181
        %p379 = pneg %p178
        %p380 = pneg %p202
        %p381 = pneg %p199
        %p382 = pneg %p223
        %p383 = pneg %p220
        %p384 = pneg %p249
        %p385 = pneg %p246
        %s386 = sand.u32 %s236, 1
        %s387 = scalar_lea.sflag [#allocation4], %s386
        %s388 = sand.u32 %s236, 1
        %s389 = smul.addr %s388, 128
        %s390 = scalar_lea.vmem [#allocation7], %s389
        %v392 = vld [vmem:[%s342] sm:$0xff]
        %v393 = vld [vmem:[%s342 + $0x8] sm:$0xff]
        %v394 = vld [vmem:[%s342 + $0x10] sm:$0xff]
        %v395 = vld [vmem:[%s342 + $0x18] sm:$0xff]
        %v396 = vld [vmem:[%s342 + $0x20] sm:$0xff]
        %v397 = vld [vmem:[%s342 + $0x28] sm:$0xff]
        %v398 = vld [vmem:[%s342 + $0x30] sm:$0xff]
        %v399 = vld [vmem:[%s342 + $0x38] sm:$0xff]
        %v400 = vld [vmem:[%s342 + $0x40] sm:$0xff]
        %v401 = vld [vmem:[%s342 + $0x48] sm:$0xff]
        %v402 = vld [vmem:[%s342 + $0x50] sm:$0xff]
        %v403 = vld [vmem:[%s342 + $0x58] sm:$0xff]
        %v404 = vld [vmem:[%s342 + $0x60] sm:$0xff]
        %v405 = vld [vmem:[%s342 + $0x68] sm:$0xff]
        %v406 = vld [vmem:[%s342 + $0x70] sm:$0xff]
        %v407 = vld [vmem:[%s342 + $0x78] sm:$0xff]
        %v408 = vld [vmem:[%s351] sm:$0xff]
        %v409 = vld [vmem:[%s351 + $0x8] sm:$0xff]
        %v410 = vld [vmem:[%s351 + $0x10] sm:$0xff]
        %v411 = vld [vmem:[%s351 + $0x18] sm:$0xff]
        %v412 = vld [vmem:[%s351 + $0x20] sm:$0xff]
        %v413 = vld [vmem:[%s351 + $0x28] sm:$0xff]
        %v414 = vld [vmem:[%s351 + $0x30] sm:$0xff]
        %v415 = vld [vmem:[%s351 + $0x38] sm:$0xff]
        %v416 = vld [vmem:[%s351 + $0x40] sm:$0xff]
        %v417 = vld [vmem:[%s351 + $0x48] sm:$0xff]
        %v418 = vld [vmem:[%s351 + $0x50] sm:$0xff]
        %v419 = vld [vmem:[%s351 + $0x58] sm:$0xff]
        %v420 = vld [vmem:[%s351 + $0x60] sm:$0xff]
        %v421 = vld [vmem:[%s351 + $0x68] sm:$0xff]
        %v422 = vld [vmem:[%s351 + $0x70] sm:$0xff]
        %v423 = vld [vmem:[%s351 + $0x78] sm:$0xff]
        %v424 = vadd.f32 %v392, %v408
        %v425 = vadd.f32 %v393, %v409
        %v426 = vadd.f32 %v394, %v410
        %v427 = vadd.f32 %v395, %v411
        %v428 = vadd.f32 %v396, %v412
        %v429 = vadd.f32 %v397, %v413
        %v430 = vadd.f32 %v398, %v414
        %v431 = vadd.f32 %v399, %v415
        %v432 = vadd.f32 %v400, %v416
        %v433 = vadd.f32 %v401, %v417
        %v434 = vadd.f32 %v402, %v418
        %v435 = vadd.f32 %v403, %v419
        %v436 = vadd.f32 %v404, %v420
        %v437 = vadd.f32 %v405, %v421
        %v438 = vadd.f32 %v406, %v422
        %v439 = vadd.f32 %v407, %v423
        %v440 = vpack.c.bf16 %v426, %v424
        %v441 = vpack.c.bf16 %v427, %v425
        %v442 = vpack.c.bf16 %v430, %v428
        %v443 = vpack.c.bf16 %v431, %v429
        %v444 = vpack.c.bf16 %v434, %v432
        %v445 = vpack.c.bf16 %v435, %v433
        %v446 = vpack.c.bf16 %v438, %v436
        %v447 = vpack.c.bf16 %v439, %v437
        %v448 = vld [vmem:[%s2] sm:$0xf]
        %v449 = vld [vmem:[%s2 + $0x4] sm:$0xf]
        %v450 = vld [vmem:[%s2 + $0x8] sm:$0xf]
        %v451 = vld [vmem:[%s2 + $0xc] sm:$0xf]
        %v456 = vunpack.c.l.b16 %v448
        %v457 = vunpack.c.l.b16 %v449
        %v458 = vunpack.c.l.b16 %v450
        %v459 = vunpack.c.l.b16 %v451
        %v460 = vpack.c.b16 %v457, %v456
        %v461 = vpack.c.b16 %v459, %v458
        %vm462 = vcmask 523264
        %v464 = vsel %vm462, %v460, 0
        %v467 = vsel %vm462, %v461, 0
        %469 = vmatprep.subr.bf16.mxu0 %v441
        %470 = vmatpush1.bf16.msra.mxu0 %v440
        %471 = vmatprep.subr.bf16.mxu0 %v443
        %472 = vmatpush1.bf16.msra.mxu0 %v442
        %473 = vmatprep.subr.bf16.mxu0 %v445
        %474 = vmatpush1.bf16.msra.mxu0 %v444
        %475 = vmatprep.subr.bf16.mxu0 %v447
        %476 = vmatpush1.bf16.msra.mxu0 %v446
        %477 = vmatprep.subr.bf16.mxu0 0
        %478 = vmatpush1.bf16.msra.mxu0 0
        %479 = vmatprep.subr.bf16.mxu0 0
        %480 = vmatpush1.bf16.msra.mxu0 0
        %481 = vmatprep.subr.bf16.mxu0 0
        %482 = vmatpush1.bf16.msra.mxu0 0
        %483 = vmatprep.subr.bf16.mxu0 0
        %484 = vmatpush1.bf16.msra.mxu0 0
        %485 = vmatprep.subr.bf16.mxu0 0
        %486 = vmatpush1.bf16.msra.mxu0 0
        %487 = vmatprep.subr.bf16.mxu0 0
        %488 = vmatpush1.bf16.msra.mxu0 0
        %489 = vmatprep.subr.bf16.mxu0 0
        %490 = vmatpush1.bf16.msra.mxu0 0
        %491 = vmatprep.subr.bf16.mxu0 0
        %492 = vmatpush1.bf16.msra.mxu0 0
        %493 = vmatprep.subr.bf16.mxu0 0
        %494 = vmatpush1.bf16.msra.mxu0 0
        %495 = vmatprep.subr.bf16.mxu0 0
        %496 = vmatpush1.bf16.msra.mxu0 0
        %497 = vmatprep.subr.bf16.mxu0 0
        %498 = vmatpush1.bf16.msra.mxu0 0
        %499 = vmatprep.subr.bf16.mxu0 0
        %500 = vmatpush1.bf16.msra.mxu0 0
        %501 = vmatprep.mubr.bf16.mxu0 0
        %502 = vmatmul.mubr.bf16.gmra.mrb[0].mxu0 %v464
        %v503 = vpop.f32.mrb[0].mxu0
        %v504 = vadd.f32 0.0, %v503
        %v505 = vpop.f32.mrb[0].mxu0
        %v506 = vadd.f32 0.0, %v505
        %v507 = vpop.f32.mrb[0].mxu0
        %v508 = vadd.f32 0.0, %v507
        %v509 = vpop.f32.mrb[0].mxu0
        %v510 = vadd.f32 0.0, %v509
        %511 = vmatprep.mubr.bf16.mxu0 0
        %512 = vmatmul.mubr.bf16.gmra.mrb[0].mxu0 %v467
        %v513 = vpop.f32.mrb[0].mxu0
        %v514 = vadd.f32 0.0, %v513
        %v515 = vpop.f32.mrb[0].mxu0
        %v516 = vadd.f32 0.0, %v515
        %v517 = vpop.f32.mrb[0].mxu0
        %v518 = vadd.f32 0.0, %v517
        %v519 = vpop.f32.mrb[0].mxu0
        %v520 = vadd.f32 0.0, %v519
        %521 = vdwg.mxu0
        %v522 = vld [vmem:[%s3] sm:$0xff]
        %v523 = vld [vmem:[%s3 + $0x8] sm:$0xff]
        %525 = vset.pattern.permute.xlu0 0
        %526 = vperm.xlu0 %525, %v522
        %v527 = vpop.permute.xlu0 %526
        %530 = vset.pattern.permute.xlu0 0
        %531 = vperm.xlu0 %530, %v523
        %v532 = vpop.permute.xlu0 %531
        %v534 = vadd.f32 %v504, %v527
        %v535 = vadd.f32 %v506, %v527
        %v536 = vadd.f32 %v508, %v532
        %v537 = vadd.f32 %v510, %v532
        %v538 = vmax.f32 %v534, 0.0
        %v539 = vmax.f32 %v535, 0.0
        %v540 = vmax.f32 %v536, 0.0
        %v541 = vmax.f32 %v537, 0.0
        %v542 = vld [vmem:[%s5] sm:$0xf]
        %v543 = vld [vmem:[%s5 + $0x4] sm:$0xf]
        %v544 = vld [vmem:[%s5 + $0x8] sm:$0xf]
        %v545 = vld [vmem:[%s5 + $0xc] sm:$0xf]
        %v546 = vld [vmem:[%s5 + $0x10] sm:$0xf]
        %v547 = vld [vmem:[%s5 + $0x14] sm:$0xf]
        %v548 = vld [vmem:[%s5 + $0x18] sm:$0xf]
        %v549 = vld [vmem:[%s5 + $0x1c] sm:$0xf]
        %v550 = vpack.c.bf16 %v540, %v538
        %v551 = vpack.c.bf16 %v541, %v539
        %v552 = vld [vmem:[%s6] sm:$0xff]
        %v553 = vld [vmem:[%s6 + $0x8] sm:$0xff]
        %v554 = vld [vmem:[%s6 + $0x10] sm:$0xff]
        %v555 = vld [vmem:[%s6 + $0x18] sm:$0xff]
        %v556 = vld [vmem:[%s6 + $0x20] sm:$0xff]
        %v557 = vld [vmem:[%s6 + $0x28] sm:$0xff]
        %v558 = vld [vmem:[%s6 + $0x30] sm:$0xff]
        %v559 = vld [vmem:[%s6 + $0x38] sm:$0xff]
        %561 = vset.pattern.permute.xlu0 0
        %562 = vperm.xlu0 %561, %v552
        %v563 = vpop.permute.xlu0 %562
        %566 = vset.pattern.permute.xlu0 0
        %567 = vperm.xlu0 %566, %v553
        %v568 = vpop.permute.xlu0 %567
        %571 = vset.pattern.permute.xlu0 0
        %572 = vperm.xlu0 %571, %v554
        %v573 = vpop.permute.xlu0 %572
        %576 = vset.pattern.permute.xlu0 0
        %577 = vperm.xlu0 %576, %v555
        %v578 = vpop.permute.xlu0 %577
        %581 = vset.pattern.permute.xlu0 0
        %582 = vperm.xlu0 %581, %v556
        %v583 = vpop.permute.xlu0 %582
        %586 = vset.pattern.permute.xlu0 0
        %587 = vperm.xlu0 %586, %v557
        %v588 = vpop.permute.xlu0 %587
        %591 = vset.pattern.permute.xlu0 0
        %592 = vperm.xlu0 %591, %v558
        %v593 = vpop.permute.xlu0 %592
        %596 = vset.pattern.permute.xlu0 0
        %597 = vperm.xlu0 %596, %v559
        %v598 = vpop.permute.xlu0 %597
        %v608 = vunpack.c.l.b16 %v542
        %v609 = vunpack.c.l.b16 %v543
        %v610 = vunpack.c.l.b16 %v544
        %v611 = vunpack.c.l.b16 %v545
        %v612 = vunpack.c.l.b16 %v546
        %v613 = vunpack.c.l.b16 %v547
        %v614 = vunpack.c.l.b16 %v548
        %v615 = vunpack.c.l.b16 %v549
        %v616 = vpack.c.b16 %v609, %v608
        %v617 = vpack.c.b16 %v611, %v610
        %v618 = vpack.c.b16 %v613, %v612
        %v619 = vpack.c.b16 %v615, %v614
        %vm620 = vcmask 130048
        %v622 = vsel %vm620, %v616, 0
        %v625 = vsel %vm620, %v617, 0
        %v628 = vsel %vm620, %v618, 0
        %v631 = vsel %vm620, %v619, 0
        %633 = vmatprep.subr.bf16.mxu0 %v551
        %634 = vmatpush1.bf16.msra.mxu0 %v550
        %635 = vmatprep.subr.bf16.mxu0 0
        %636 = vmatpush1.bf16.msra.mxu0 0
        %637 = vmatprep.subr.bf16.mxu0 0
        %638 = vmatpush1.bf16.msra.mxu0 0
        %639 = vmatprep.subr.bf16.mxu0 0
        %640 = vmatpush1.bf16.msra.mxu0 0
        %641 = vmatprep.subr.bf16.mxu0 0
        %642 = vmatpush1.bf16.msra.mxu0 0
        %643 = vmatprep.subr.bf16.mxu0 0
        %644 = vmatpush1.bf16.msra.mxu0 0
        %645 = vmatprep.subr.bf16.mxu0 0
        %646 = vmatpush1.bf16.msra.mxu0 0
        %647 = vmatprep.subr.bf16.mxu0 0
        %648 = vmatpush1.bf16.msra.mxu0 0
        %649 = vmatprep.subr.bf16.mxu0 0
        %650 = vmatpush1.bf16.msra.mxu0 0
        %651 = vmatprep.subr.bf16.mxu0 0
        %652 = vmatpush1.bf16.msra.mxu0 0
        %653 = vmatprep.subr.bf16.mxu0 0
        %654 = vmatpush1.bf16.msra.mxu0 0
        %655 = vmatprep.subr.bf16.mxu0 0
        %656 = vmatpush1.bf16.msra.mxu0 0
        %657 = vmatprep.subr.bf16.mxu0 0
        %658 = vmatpush1.bf16.msra.mxu0 0
        %659 = vmatprep.subr.bf16.mxu0 0
        %660 = vmatpush1.bf16.msra.mxu0 0
        %661 = vmatprep.subr.bf16.mxu0 0
        %662 = vmatpush1.bf16.msra.mxu0 0
        %663 = vmatprep.subr.bf16.mxu0 0
        %664 = vmatpush1.bf16.msra.mxu0 0
        %665 = vmatprep.mubr.bf16.mxu0 0
        %666 = vmatmul.mubr.bf16.gmra.mrb[0].mxu0 %v622
        %v667 = vpop.f32.mrb[0].mxu0
        %v668 = vadd.f32 %v563, %v667
        %v669 = vpop.f32.mrb[0].mxu0
        %v670 = vadd.f32 %v563, %v669
        %v671 = vpop.f32.mrb[0].mxu0
        %v672 = vadd.f32 %v568, %v671
        %v673 = vpop.f32.mrb[0].mxu0
        %v674 = vadd.f32 %v568, %v673
        %675 = vmatprep.mubr.bf16.mxu0 0
        %676 = vmatmul.mubr.bf16.gmra.mrb[0].mxu0 %v625
        %v677 = vpop.f32.mrb[0].mxu0
        %v678 = vadd.f32 %v573, %v677
        %v679 = vpop.f32.mrb[0].mxu0
        %v680 = vadd.f32 %v573, %v679
        %v681 = vpop.f32.mrb[0].mxu0
        %v682 = vadd.f32 %v578, %v681
        %v683 = vpop.f32.mrb[0].mxu0
        %v684 = vadd.f32 %v578, %v683
        %685 = vmatprep.mubr.bf16.mxu0 0
        %686 = vmatmul.mubr.bf16.gmra.mrb[0].mxu0 %v628
        %v687 = vpop.f32.mrb[0].mxu0
        %v688 = vadd.f32 %v583, %v687
        %v689 = vpop.f32.mrb[0].mxu0
        %v690 = vadd.f32 %v583, %v689
        %v691 = vpop.f32.mrb[0].mxu0
        %v692 = vadd.f32 %v588, %v691
        %v693 = vpop.f32.mrb[0].mxu0
        %v694 = vadd.f32 %v588, %v693
        %695 = vmatprep.mubr.bf16.mxu0 0
        %696 = vmatmul.mubr.bf16.gmra.mrb[0].mxu0 %v631
        %v697 = vpop.f32.mrb[0].mxu0
        %v698 = vadd.f32 %v593, %v697
        %v699 = vpop.f32.mrb[0].mxu0
        %v700 = vadd.f32 %v593, %v699
        %v701 = vpop.f32.mrb[0].mxu0
        %v702 = vadd.f32 %v598, %v701
        %v703 = vpop.f32.mrb[0].mxu0
        %v704 = vadd.f32 %v598, %v703
        %705 = vdwg.mxu0
        %v706 = vadd.f32 %v514, %v516
        %707 = vadd.xlane.f32.xlu0 %v706
        %v708 = vpop.xlane.xlu0 %707
        %v709 = vadd.f32 %v518, %v520
        %710 = vadd.xlane.f32.xlu0 %v709
        %v711 = vpop.xlane.xlu0 %710
        %v712 = vld [vmem:[%s4] sm:$0xff]
        %v713 = vld [vmem:[%s4 + $0x8] sm:$0xff]
        %v714 = vadd.f32 %v708, %v712
        %v715 = vadd.f32 %v711, %v713
        %v716 = vmax.f32 %v714, 0.0
        %v717 = vmax.f32 %v715, 0.0
        %v718 = vld [vmem:[%s7] sm:$0xf]
        %v719 = vld [vmem:[%s7 + $0x4] sm:$0xf]
        %v720 = vld [vmem:[%s7 + $0x8] sm:$0xf]
        %v721 = vld [vmem:[%s7 + $0xc] sm:$0xf]
        %v722 = vld [vmem:[%s7 + $0x10] sm:$0xf]
        %v723 = vld [vmem:[%s7 + $0x14] sm:$0xf]
        %v724 = vld [vmem:[%s7 + $0x18] sm:$0xf]
        %v725 = vld [vmem:[%s7 + $0x1c] sm:$0xf]
        %v726 = vunpack.c.l.bf16 %v718
        %v727 = vunpack.c.l.bf16 %v719
        %v728 = vunpack.c.l.bf16 %v720
        %v729 = vunpack.c.l.bf16 %v721
        %v730 = vunpack.c.l.bf16 %v722
        %v731 = vunpack.c.l.bf16 %v723
        %v732 = vunpack.c.l.bf16 %v724
        %v733 = vunpack.c.l.bf16 %v725
        %v734 = vld [vmem:[%s8] sm:$0xff]
        %v735 = vld [vmem:[%s8 + $0x8] sm:$0xff]
        %v736 = vld [vmem:[%s8 + $0x10] sm:$0xff]
        %v737 = vld [vmem:[%s8 + $0x18] sm:$0xff]
        %v738 = vld [vmem:[%s8 + $0x20] sm:$0xff]
        %v739 = vld [vmem:[%s8 + $0x28] sm:$0xff]
        %v740 = vld [vmem:[%s8 + $0x30] sm:$0xff]
        %v741 = vld [vmem:[%s8 + $0x38] sm:$0xff]
        %v743 = vsel %vm620, %v726, 0
        %v746 = vsel %vm620, %v727, 0
        %v749 = vsel %vm620, %v728, 0
        %v752 = vsel %vm620, %v729, 0
        %v755 = vsel %vm620, %v730, 0
        %v758 = vsel %vm620, %v731, 0
        %v761 = vsel %vm620, %v732, 0
        %v764 = vsel %vm620, %v733, 0
        %766 = vmatprep.subr.mxu0 0.0
        %767 = vmatpush1.msra.mxu0 %v716
        %768 = vmatprep.subr.mxu0 0.0
        %769 = vmatpush1.msra.mxu0 %v717
        %770 = vmatprep.subr.mxu0 0.0
        %771 = vmatpush1.msra.mxu0 0.0
        %772 = vmatprep.subr.mxu0 0.0
        %773 = vmatpush1.msra.mxu0 0.0
        %774 = vmatprep.subr.mxu0 0.0
        %775 = vmatpush1.msra.mxu0 0.0
        %776 = vmatprep.subr.mxu0 0.0
        %777 = vmatpush1.msra.mxu0 0.0
        %778 = vmatprep.subr.mxu0 0.0
        %779 = vmatpush1.msra.mxu0 0.0
        %780 = vmatprep.subr.mxu0 0.0
        %781 = vmatpush1.msra.mxu0 0.0
        %782 = vmatprep.subr.mxu0 0.0
        %783 = vmatpush1.msra.mxu0 0.0
        %784 = vmatprep.subr.mxu0 0.0
        %785 = vmatpush1.msra.mxu0 0.0
        %786 = vmatprep.subr.mxu0 0.0
        %787 = vmatpush1.msra.mxu0 0.0
        %788 = vmatprep.subr.mxu0 0.0
        %789 = vmatpush1.msra.mxu0 0.0
        %790 = vmatprep.subr.mxu0 0.0
        %791 = vmatpush1.msra.mxu0 0.0
        %792 = vmatprep.subr.mxu0 0.0
        %793 = vmatpush1.msra.mxu0 0.0
        %794 = vmatprep.subr.mxu0 0.0
        %795 = vmatpush1.msra.mxu0 0.0
        %796 = vmatprep.subr.mxu0 0.0
        %797 = vmatpush1.msra.mxu0 0.0
        %798 = vmatprep.subr.mxu0 0.0
        %799 = vmatpush1.msra.mxu0 0.0
        %800 = vmatprep.subr.mxu0 0.0
        %801 = vmatpush1.msra.mxu0 0.0
        %802 = vmatprep.subr.mxu0 0.0
        %803 = vmatpush1.msra.mxu0 0.0
        %804 = vmatprep.subr.mxu0 0.0
        %805 = vmatpush1.msra.mxu0 0.0
        %806 = vmatprep.subr.mxu0 0.0
        %807 = vmatpush1.msra.mxu0 0.0
        %808 = vmatprep.subr.mxu0 0.0
        %809 = vmatpush1.msra.mxu0 0.0
        %810 = vmatprep.subr.mxu0 0.0
        %811 = vmatpush1.msra.mxu0 0.0
        %812 = vmatprep.subr.mxu0 0.0
        %813 = vmatpush1.msra.mxu0 0.0
        %814 = vmatprep.subr.mxu0 0.0
        %815 = vmatpush1.msra.mxu0 0.0
        %816 = vmatprep.subr.mxu0 0.0
        %817 = vmatpush1.msra.mxu0 0.0
        %818 = vmatprep.subr.mxu0 0.0
        %819 = vmatpush1.msra.mxu0 0.0
        %820 = vmatprep.subr.mxu0 0.0
        %821 = vmatpush1.msra.mxu0 0.0
        %822 = vmatprep.subr.mxu0 0.0
        %823 = vmatpush1.msra.mxu0 0.0
        %824 = vmatprep.subr.mxu0 0.0
        %825 = vmatpush1.msra.mxu0 0.0
        %826 = vmatprep.subr.mxu0 0.0
        %827 = vmatpush1.msra.mxu0 0.0
        %828 = vmatprep.subr.mxu0 0.0
        %829 = vmatpush1.msra.mxu0 0.0
        %830 = vmatprep.mubr.f32.mxu0 0.0
        %831 = vmatmul.mubr.f32.gmra.mrb[0].mxu0 %v743
        %v832 = vpop.f32.mrb[0].mxu0
        %v833 = vadd.f32 %v734, %v832
        %v834 = vpop.f32.mrb[0].mxu0
        %835 = vmatprep.mubr.f32.mxu0 0.0
        %836 = vmatmul.mubr.f32.gmra.mrb[0].mxu0 %v746
        %v837 = vpop.f32.mrb[0].mxu0
        %v838 = vadd.f32 %v735, %v837
        %v839 = vpop.f32.mrb[0].mxu0
        %840 = vmatprep.mubr.f32.mxu0 0.0
        %841 = vmatmul.mubr.f32.gmra.mrb[0].mxu0 %v749
        %v842 = vpop.f32.mrb[0].mxu0
        %v843 = vadd.f32 %v736, %v842
        %v844 = vpop.f32.mrb[0].mxu0
        %845 = vmatprep.mubr.f32.mxu0 0.0
        %846 = vmatmul.mubr.f32.gmra.mrb[0].mxu0 %v752
        %v847 = vpop.f32.mrb[0].mxu0
        %v848 = vadd.f32 %v737, %v847
        %v849 = vpop.f32.mrb[0].mxu0
        %850 = vmatprep.mubr.f32.mxu0 0.0
        %851 = vmatmul.mubr.f32.gmra.mrb[0].mxu0 %v755
        %v852 = vpop.f32.mrb[0].mxu0
        %v853 = vadd.f32 %v738, %v852
        %v854 = vpop.f32.mrb[0].mxu0
        %855 = vmatprep.mubr.f32.mxu0 0.0
        %856 = vmatmul.mubr.f32.gmra.mrb[0].mxu0 %v758
        %v857 = vpop.f32.mrb[0].mxu0
        %v858 = vadd.f32 %v739, %v857
        %v859 = vpop.f32.mrb[0].mxu0
        %860 = vmatprep.mubr.f32.mxu0 0.0
        %861 = vmatmul.mubr.f32.gmra.mrb[0].mxu0 %v761
        %v862 = vpop.f32.mrb[0].mxu0
        %v863 = vadd.f32 %v740, %v862
        %v864 = vpop.f32.mrb[0].mxu0
        %865 = vmatprep.mubr.f32.mxu0 0.0
        %866 = vmatmul.mubr.f32.gmra.mrb[0].mxu0 %v764
        %v867 = vpop.f32.mrb[0].mxu0
        %v868 = vadd.f32 %v741, %v867
        %v869 = vpop.f32.mrb[0].mxu0
        %870 = vdwg.mxu0
        %872 = vset.pattern.permute.xlu0 0
        %873 = vperm.xlu0 %872, %v833
        %v874 = vpop.permute.xlu0 %873
        %877 = vset.pattern.permute.xlu0 0
        %878 = vperm.xlu0 %877, %v838
        %v879 = vpop.permute.xlu0 %878
        %882 = vset.pattern.permute.xlu0 0
        %883 = vperm.xlu0 %882, %v843
        %v884 = vpop.permute.xlu0 %883
        %887 = vset.pattern.permute.xlu0 0
        %888 = vperm.xlu0 %887, %v848
        %v889 = vpop.permute.xlu0 %888
        %892 = vset.pattern.permute.xlu0 0
        %893 = vperm.xlu0 %892, %v853
        %v894 = vpop.permute.xlu0 %893
        %897 = vset.pattern.permute.xlu0 0
        %898 = vperm.xlu0 %897, %v858
        %v899 = vpop.permute.xlu0 %898
        %902 = vset.pattern.permute.xlu0 0
        %903 = vperm.xlu0 %902, %v863
        %v904 = vpop.permute.xlu0 %903
        %907 = vset.pattern.permute.xlu0 0
        %908 = vperm.xlu0 %907, %v868
        %v909 = vpop.permute.xlu0 %908
        %v911 = vadd.f32 %v668, %v874
        %v912 = vadd.f32 %v670, %v874
        %v913 = vadd.f32 %v672, %v879
        %v914 = vadd.f32 %v674, %v879
        %v915 = vadd.f32 %v678, %v884
        %v916 = vadd.f32 %v680, %v884
        %v917 = vadd.f32 %v682, %v889
        %v918 = vadd.f32 %v684, %v889
        %v919 = vadd.f32 %v688, %v894
        %v920 = vadd.f32 %v690, %v894
        %v921 = vadd.f32 %v692, %v899
        %v922 = vadd.f32 %v694, %v899
        %v923 = vadd.f32 %v698, %v904
        %v924 = vadd.f32 %v700, %v904
        %v925 = vadd.f32 %v702, %v909
        %v926 = vadd.f32 %v704, %v909
        %v927 = vmul.f32 %v911, 0.5
        %v928 = vmul.f32 %v912, 0.5
        %v929 = vmul.f32 %v913, 0.5
        %v930 = vmul.f32 %v914, 0.5
        %v931 = vmul.f32 %v915, 0.5
        %v932 = vmul.f32 %v916, 0.5
        %v933 = vmul.f32 %v917, 0.5
        %v934 = vmul.f32 %v918, 0.5
        %v935 = vmul.f32 %v919, 0.5
        %v936 = vmul.f32 %v920, 0.5
        %v937 = vmul.f32 %v921, 0.5
        %v938 = vmul.f32 %v922, 0.5
        %v939 = vmul.f32 %v923, 0.5
        %v940 = vmul.f32 %v924, 0.5
        %v941 = vmul.f32 %v925, 0.5
        %v942 = vmul.f32 %v926, 0.5
        %v943 = vtanh.pop %v927
        %v944 = vtanh.pop %v928
        %v945 = vtanh.pop %v929
        %v946 = vtanh.pop %v930
        %v947 = vtanh.pop %v931
        %v948 = vtanh.pop %v932
        %v949 = vtanh.pop %v933
        %v950 = vtanh.pop %v934
        %v951 = vtanh.pop %v935
        %v952 = vtanh.pop %v936
        %v953 = vtanh.pop %v937
        %v954 = vtanh.pop %v938
        %v955 = vtanh.pop %v939
        %v956 = vtanh.pop %v940
        %v957 = vtanh.pop %v941
        %v958 = vtanh.pop %v942
        %v959 = vmul.f32 %v943, 0.5
        %v960 = vmul.f32 %v944, 0.5
        %v961 = vmul.f32 %v945, 0.5
        %v962 = vmul.f32 %v946, 0.5
        %v963 = vmul.f32 %v947, 0.5
        %v964 = vmul.f32 %v948, 0.5
        %v965 = vmul.f32 %v949, 0.5
        %v966 = vmul.f32 %v950, 0.5
        %v967 = vmul.f32 %v951, 0.5
        %v968 = vmul.f32 %v952, 0.5
        %v969 = vmul.f32 %v953, 0.5
        %v970 = vmul.f32 %v954, 0.5
        %v971 = vmul.f32 %v955, 0.5
        %v972 = vmul.f32 %v956, 0.5
        %v973 = vmul.f32 %v957, 0.5
        %v974 = vmul.f32 %v958, 0.5
        %v975 = vadd.f32 %v959, 0.5
        %v976 = vadd.f32 %v960, 0.5
        %v977 = vadd.f32 %v961, 0.5
        %v978 = vadd.f32 %v962, 0.5
        %v979 = vadd.f32 %v963, 0.5
        %v980 = vadd.f32 %v964, 0.5
        %v981 = vadd.f32 %v965, 0.5
        %v982 = vadd.f32 %v966, 0.5
        %v983 = vadd.f32 %v967, 0.5
        %v984 = vadd.f32 %v968, 0.5
        %v985 = vadd.f32 %v969, 0.5
        %v986 = vadd.f32 %v970, 0.5
        %v987 = vadd.f32 %v971, 0.5
        %v988 = vadd.f32 %v972, 0.5
        %v989 = vadd.f32 %v973, 0.5
        %v990 = vadd.f32 %v974, 0.5
        %v991 = vsub.f32 %v392, %v408
        %v992 = vsub.f32 %v393, %v409
        %v993 = vsub.f32 %v394, %v410
        %v994 = vsub.f32 %v395, %v411
        %v995 = vsub.f32 %v396, %v412
        %v996 = vsub.f32 %v397, %v413
        %v997 = vsub.f32 %v398, %v414
        %v998 = vsub.f32 %v399, %v415
        %v999 = vsub.f32 %v400, %v416
        %v1000 = vsub.f32 %v401, %v417
        %v1001 = vsub.f32 %v402, %v418
        %v1002 = vsub.f32 %v403, %v419
        %v1003 = vsub.f32 %v404, %v420
        %v1004 = vsub.f32 %v405, %v421
        %v1005 = vsub.f32 %v406, %v422
        %v1006 = vsub.f32 %v407, %v423
        %v1007 = vmul.f32 %v991, %v975
        %v1008 = vmul.f32 %v992, %v976
        %v1009 = vmul.f32 %v993, %v977
        %v1010 = vmul.f32 %v994, %v978
        %v1011 = vmul.f32 %v995, %v979
        %v1012 = vmul.f32 %v996, %v980
        %v1013 = vmul.f32 %v997, %v981
        %v1014 = vmul.f32 %v998, %v982
        %v1015 = vmul.f32 %v999, %v983
        %v1016 = vmul.f32 %v1000, %v984
        %v1017 = vmul.f32 %v1001, %v985
        %v1018 = vmul.f32 %v1002, %v986
        %v1019 = vmul.f32 %v1003, %v987
        %v1020 = vmul.f32 %v1004, %v988
        %v1021 = vmul.f32 %v1005, %v989
        %v1022 = vmul.f32 %v1006, %v990
        %v1023 = vadd.f32 %v408, %v1007
        %v1024 = vadd.f32 %v409, %v1008
        %v1025 = vadd.f32 %v410, %v1009
        %v1026 = vadd.f32 %v411, %v1010
        %v1027 = vadd.f32 %v412, %v1011
        %v1028 = vadd.f32 %v413, %v1012
        %v1029 = vadd.f32 %v414, %v1013
        %v1030 = vadd.f32 %v415, %v1014
        %v1031 = vadd.f32 %v416, %v1015
        %v1032 = vadd.f32 %v417, %v1016
        %v1033 = vadd.f32 %v418, %v1017
        %v1034 = vadd.f32 %v419, %v1018
        %v1035 = vadd.f32 %v420, %v1019
        %v1036 = vadd.f32 %v421, %v1020
        %v1037 = vadd.f32 %v422, %v1021
        %v1038 = vadd.f32 %v423, %v1022
        %v1039 = vmul.f32 %v1023, 2.0
        %v1040 = vmul.f32 %v1024, 2.0
        %v1041 = vmul.f32 %v1025, 2.0
        %v1042 = vmul.f32 %v1026, 2.0
        %v1043 = vmul.f32 %v1027, 2.0
        %v1044 = vmul.f32 %v1028, 2.0
        %v1045 = vmul.f32 %v1029, 2.0
        %v1046 = vmul.f32 %v1030, 2.0
        %v1047 = vmul.f32 %v1031, 2.0
        %v1048 = vmul.f32 %v1032, 2.0
        %v1049 = vmul.f32 %v1033, 2.0
        %v1050 = vmul.f32 %v1034, 2.0
        %v1051 = vmul.f32 %v1035, 2.0
        %v1052 = vmul.f32 %v1036, 2.0
        %v1053 = vmul.f32 %v1037, 2.0
        %v1054 = vmul.f32 %v1038, 2.0
        %1055 = vst [vmem:[%s390] sm:$0xff] %v1039
        %1056 = vst [vmem:[%s390 + $0x8] sm:$0xff] %v1040
        %1057 = vst [vmem:[%s390 + $0x10] sm:$0xff] %v1041
        %1058 = vst [vmem:[%s390 + $0x18] sm:$0xff] %v1042
        %1059 = vst [vmem:[%s390 + $0x20] sm:$0xff] %v1043
        %1060 = vst [vmem:[%s390 + $0x28] sm:$0xff] %v1044
        %1061 = vst [vmem:[%s390 + $0x30] sm:$0xff] %v1045
        %1062 = vst [vmem:[%s390 + $0x38] sm:$0xff] %v1046
        %1063 = vst [vmem:[%s390 + $0x40] sm:$0xff] %v1047
        %1064 = vst [vmem:[%s390 + $0x48] sm:$0xff] %v1048
        %1065 = vst [vmem:[%s390 + $0x50] sm:$0xff] %v1049
        %1066 = vst [vmem:[%s390 + $0x58] sm:$0xff] %v1050
        %1067 = vst [vmem:[%s390 + $0x60] sm:$0xff] %v1051
        %1068 = vst [vmem:[%s390 + $0x68] sm:$0xff] %v1052
        %1069 = vst [vmem:[%s390 + $0x70] sm:$0xff] %v1053
        %1070 = vst [vmem:[%s390 + $0x78] sm:$0xff] %v1054
        %s1071 = sand.u32 %s236, 1
        %s1072 = scalar_lea.sflag [#allocation4], %s1071
        %s1073 = sand.u32 %s236, 1
        %s1074 = smul.addr %s1073, 128
        %s1075 = scalar_lea.vmem [#allocation7], %s1074
        // Predicated region
        $region65: #{tpu_custom_call.1} parent=55 // pred_check
          %p1076 = pneg %p246
        $region66: #{tpu_custom_call.1} parent=55 // pred_check_branch
          %1078 = sbr.rel (%p1076) target = $region68
        $region67: #{tpu_custom_call.1} parent=55 // pred_region
          %s1080 = ssub.s32 2048, 2048
          %1081 = vsyncadd %s1072, %s1080
          %s1082 = smul.addr %s29, 16
          %s1083 = smul.addr %s1082, 128
          %s1084 = scalar_lea.hbm %s9, %s1083
          %s1085 = sshll.u32 %s1075, 4
          %s1086 = int_to_ptr.vmem [resolvable:$true] %s1085
          %1091 = dma.vmem_to_hbm [thread:$0]  %s1086, 2048, %s1084, %s1072, 256, 256, 16
        $region68: #{tpu_custom_call.1} parent=55 // pred_fallthru
          _
      $region56: #{tpu_custom_call.1} parent=5 // pred_fallthru
        _
      %p1092 = scmp.le.s32.totalorder 2, %s24
      // Predicated region
      $region69: #{tpu_custom_call.1} parent=5 // pred_check
        %p1093 = pneg %p1092
      $region70: #{tpu_custom_call.1} parent=5 // pred_check_branch
        %1095 = sbr.rel (%p1093) target = $region72
      $region71: #{tpu_custom_call.1} parent=5 // pred_region
        %s1096 = ssub.s32 %s24, 2
        // Predicated region
        $region73: #{tpu_custom_call.1} parent=71 // pred_check
          %p1097 = pneg %p252
        $region74: #{tpu_custom_call.1} parent=71 // pred_check_branch
          %1099 = sbr.rel (%p1097) target = $region76
        $region75: #{tpu_custom_call.1} parent=71 // pred_region
          %s1100 = sand.u32 %s237, 1
          %s1101 = scalar_lea.sflag [#allocation4], %s1100
          %s1102 = sand.u32 %s237, 1
          %s1103 = smul.addr %s1102, 128
          %s1104 = scalar_lea.vmem [#allocation7], %s1103
          %1105 = dma.done %s1101, 2048
        $region76: #{tpu_custom_call.1} parent=71 // pred_fallthru
          _
      $region72: #{tpu_custom_call.1} parent=5 // pred_fallthru
        _
    $region6: #{tpu_custom_call.1} parent=1 // loop_footer
      %s28 = sadd.s32 1, %s24
    $region7: #{tpu_custom_call.1} parent=1 // loop_footer_branch
      %23 = sbr.rel target = $region3
    $region8: #{tpu_custom_call.1} parent=1 // loop_exit
      _
    %1106 = vsyncpa [#allocation3], 1
    %s1107 = scalar_lea.sflag [#allocation3], 1
    %1108 = vsyncpa %s1107, 1
    %1109 = vsyncpa [#allocation6], 1
    %s1110 = scalar_lea.sflag [#allocation6], 1
    %1111 = vsyncpa %s1110, 1
    %1112 = vsyncpa [#allocation4], 1
    %s1113 = scalar_lea.sflag [#allocation4], 1
    %1114 = vsyncpa %s1113, 1

</llo_original>
